<compile_context>
chip_gen: v5e
topology: v5e:2x2
jax: 0.10.0
libtpu: 0.0.40
codegen_flags: <defaults>
</compile_context>

<pallas_src>
import jax
import jax.numpy as jnp
from jax.experimental import pallas as pl
from jax.experimental.pallas import tpu as pltpu

H1 = 128
H2 = 64


def _round_up(n, m):
    return ((n + m - 1) // m) * m


def _make_kernel(*, tk, nk, w1_resident):
    """Build the MLP kernel body for a given static tiling."""

    def _epilogue(h1_pre, w2, b2, w3, b3, o_ref):
        h1 = jnp.maximum(h1_pre, 0.0)                                  # (TB,128) fp32
        h2 = jnp.dot(h1, w2, preferred_element_type=jnp.float32) + b2  # (TB,64)
        h2 = jnp.maximum(h2, 0.0)
        # Final Linear(64,1): VPU multiply + lane reduction; lane-dense store.
        out = jnp.sum(h2 * w3, axis=-1)                                # (TB,)
        out = out[None, :] + b3                                        # (1, TB)
        o_ref[...] = out.reshape(o_ref.shape).astype(o_ref.dtype)

    if nk == 1:
        # Single K step: no accumulator scratch, bias folded into the dot.
        def kernel(x_ref, w1_ref, b1_ref, w2_ref, b2_ref, w3_ref, b3_ref,
                   o_ref):
            h1_pre = jnp.dot(x_ref[...], w1_ref[...],
                             preferred_element_type=jnp.float32) + b1_ref[...]
            _epilogue(h1_pre, w2_ref[...], b2_ref[...], w3_ref[...],
                      b3_ref[...], o_ref)
        return kernel

    def kernel(x_ref, w1_ref, b1_ref, w2_ref, b2_ref, w3_ref, b3_ref,
               o_ref, h1_acc):
        k = pl.program_id(1)

        @pl.when(k == 0)
        def _():
            # Seed the accumulator with the broadcast bias: saves a (TB,128)
            # add in the epilogue on the DMA-bound last K step.
            h1_acc[...] = jnp.broadcast_to(b1_ref[...], h1_acc.shape)

        if w1_resident:
            # w1 stays fully resident in VMEM (constant index_map); slice the
            # current K block in-kernel instead of re-DMAing it per batch tile.
            k0 = pl.multiple_of(k * tk, tk)
            w1_blk = w1_ref[pl.ds(k0, tk), :]
        else:
            w1_blk = w1_ref[...]

        h1_acc[...] += jnp.dot(x_ref[...], w1_blk,
                               preferred_element_type=jnp.float32)

        @pl.when(k == pl.num_programs(1) - 1)
        def _():
            _epilogue(h1_acc[...], w2_ref[...], b2_ref[...], w3_ref[...],
                      b3_ref[...], o_ref)

    return kernel


def global_reward_predictor(state, params, *, use_bf16=None,
                            vmem_budget_bytes=None):
    """Forward pass of GlobalRewardPredictor (net_type='lin').

    state: (B, ...) — flattened to (B, input_size) like nn.Flatten().
    params: dict with w1 (F,128), b1 (1,128), w2 (128,64), b2 (1,64),
            w3 (64,1), b3 (1,1)   (weights stored as (in, out)).
    Returns: (B, 1) float32.
    """
    B = state.shape[0]
    x = state.reshape(B, -1)
    F_in = x.shape[1]

    # bf16 MXU fast path only when the input is already bf16: a wrapper-side
    # fp32->bf16 cast would roughly double end-to-end HBM bytes.
    if use_bf16 is None:
        use_bf16 = (x.dtype == jnp.bfloat16)
    in_dtype = jnp.bfloat16 if use_bf16 else jnp.float32
    bpe = 2 if use_bf16 else 4

    # ---- per-generation VMEM budget --------------------------------------
    try:
        phys_vmem = int(pltpu.get_tpu_info().vmem_capacity_bytes)
    except Exception:
        phys_vmem = 64 * 1024 * 1024          # v7x-safe fallback (64 MiB/TC)
    if vmem_budget_bytes is None:
        # ~60% of per-core VMEM, capped: v5e/v6e (128 MiB) -> 64 MiB budget,
        # v7x (64 MiB) -> ~38 MiB budget.  Headroom is left for Mosaic scratch.
        vmem_budget_bytes = min(int(phys_vmem * 0.6), 64 * 1024 * 1024)

    # ---- K (feature) tiling ----------------------------------------------
    max_tk = 4096 if use_bf16 else 2048       # bf16 blocks are half the bytes
    if F_in <= max_tk:
        TK = _round_up(F_in, 128)
        F_pad = TK
    else:
        TK = max_tk
        F_pad = _round_up(F_in, TK)
    nk = F_pad // TK

    # Keep w1 fully resident (DMA'd once) whenever it fits comfortably.
    w1_bytes = 2 * F_pad * H1 * bpe           # assume double-buffered
    w1_resident = (nk == 1) or (w1_bytes <= 16 * 1024 * 1024)

    def _cost(tb):
        c = 2 * tb * TK * bpe                            # x block (dbl-buf)
        c += w1_bytes if w1_resident else 2 * TK * H1 * bpe
        c += tb * H1 * 4                                 # fp32 accumulator
        c += 2 * tb * 4                                  # lane-dense output
        c += 512 * 1024                                  # small weights+slack
        return c

    # ---- batch tiling ------------------------------------------------------
    min_tb = 16 if use_bf16 else 8
    if vmem_budget_bytes >= 56 * 1024 * 1024:            # v5e/v6e-sized budget
        candidates = (2048, 1024, 512, 256)
    else:                                                # v7x-sized budget
        candidates = (1024, 512, 256)
    TB = 128
    for cand in candidates:
        if _cost(cand) <= vmem_budget_bytes:
            TB = cand
            break
    # Small batches: do not pad a few rows up to a full 128-row tile.
    B_r = _round_up(B, min_tb)
    if B_r < TB:
        TB = B_r
    # v7x megacore: guarantee >= 2 blocks on the parallel axis for moderate
    # batches so both TensorCores get work.
    if B_r >= 256 and _round_up(B, TB) // TB == 1:
        TB = _round_up((B_r + 1) // 2, 128)
    B_pad = _round_up(B, TB)
    nb = B_pad // TB

    # ---- dtype + padding (wrapper-side, sliced off after) ------------------
    x = x.astype(in_dtype)                    # no-op on the default path
    if B_pad != B or F_pad != F_in:
        x = jnp.pad(x, ((0, B_pad - B), (0, F_pad - F_in)))

    w1 = params["w1"].astype(in_dtype)
    if F_pad != F_in:
        w1 = jnp.pad(w1, ((0, F_pad - F_in), (0, 0)))
    b1 = params["b1"].reshape(1, H1).astype(jnp.float32)
    # Layers 2/3 stay fp32 (tiny matmuls; keeps accuracy tight on bf16 path).
    w2 = params["w2"].astype(jnp.float32)
    b2 = params["b2"].reshape(1, H2).astype(jnp.float32)
    w3 = params["w3"].reshape(1, H2).astype(jnp.float32)
    b3 = params["b3"].reshape(1, 1).astype(jnp.float32)

    if w1_resident:
        w1_spec = pl.BlockSpec((F_pad, H1), lambda i, k: (0, 0))
    else:
        w1_spec = pl.BlockSpec((TK, H1), lambda i, k: (k, 0))

    kernel = _make_kernel(tk=TK, nk=nk, w1_resident=w1_resident)
    scratch = [] if nk == 1 else [pltpu.VMEM((TB, H1), jnp.float32)]

    grid_spec = pltpu.PrefetchScalarGridSpec(
        num_scalar_prefetch=0,
        grid=(nb, nk),
        in_specs=[
            pl.BlockSpec((TB, TK), lambda i, k: (i, k)),    # x tile
            w1_spec,                                        # w1 (resident/stream)
            pl.BlockSpec((1, H1), lambda i, k: (0, 0)),     # b1
            pl.BlockSpec((H1, H2), lambda i, k: (0, 0)),    # w2
            pl.BlockSpec((1, H2), lambda i, k: (0, 0)),     # b2
            pl.BlockSpec((1, H2), lambda i, k: (0, 0)),     # w3 row
            pl.BlockSpec((1, 1), lambda i, k: (0, 0)),      # b3
        ],
        out_specs=pl.BlockSpec((1, 1, TB), lambda i, k: (i, 0, 0)),
        scratch_shapes=scratch,
    )

    # Advisory cost estimate for XLA scheduling of surrounding pad/reshape ops.
    flops = 2 * B_pad * F_pad * H1 + 2 * B_pad * H1 * H2 + 2 * B_pad * H2
    bytes_accessed = (B_pad * F_pad * bpe + F_pad * H1 * bpe
                      + (H1 * H2 + H1 + 2 * H2 + 1) * 4 + B_pad * 4)
    cost = pl.CostEstimate(flops=flops, transcendentals=0,
                           bytes_accessed=bytes_accessed)

    # Actually hand the budget to Mosaic (default scoped VMEM is only 16 MiB
    # on v5e / 32 MiB on v6e/v7x); floor at 16 MiB, cap at physical VMEM.
    vmem_limit = int(1.25 * _cost(TB)) + (2 << 20)
    vmem_limit = max(16 * 1024 * 1024, min(vmem_limit, phys_vmem))

    out = pl.pallas_call(
        kernel,
        out_shape=jax.ShapeDtypeStruct((nb, 1, TB), jnp.float32),
        grid_spec=grid_spec,
        cost_estimate=cost,
        compiler_params=pltpu.CompilerParams(
            dimension_semantics=("parallel", "arbitrary"),
            vmem_limit_bytes=vmem_limit),
    )(x, w1, b1, w2, b2, w3, b3)

    # (nb, 1, TB) lane-dense rows -> (B, 1) column.
    return out.reshape(B_pad, 1)[:B]


def init_params(key, input_size):
    """Deterministic init mimicking PyTorch's default U(-1/sqrt(fan_in), +1/sqrt(fan_in))."""
    ks = jax.random.split(key, 6)

    def lin(kw, kb, fan_in, fan_out):
        bound = 1.0 / jnp.sqrt(jnp.float32(fan_in))
        w = jax.random.uniform(kw, (fan_in, fan_out), jnp.float32, -bound, bound)
        b = jax.random.uniform(kb, (1, fan_out), jnp.float32, -bound, bound)
        return w, b

    w1, b1 = lin(ks[0], ks[1], input_size, H1)
    w2, b2 = lin(ks[2], ks[3], H1, H2)
    w3, b3 = lin(ks[4], ks[5], H2, 1)
    return {"w1": w1, "b1": b1, "w2": w2, "b2": b2, "w3": w3, "b3": b3}


def reference_forward(state, params):
    """Plain-JAX reference for correctness checking."""
    x = state.reshape(state.shape[0], -1).astype(jnp.float32)
    h1 = jnp.maximum(x @ params["w1"] + params["b1"], 0.0)
    h2 = jnp.maximum(h1 @ params["w2"] + params["b2"], 0.0)
    return h2 @ params["w3"] + params["b3"]


if __name__ == "__main__":
    key = jax.random.PRNGKey(0)
    k_in, k_par, k_in2, k_par2, k_in3 = jax.random.split(key, 5)

    # --- config 1: small image-like input (flattened to 1024 features) -----
    state = jax.random.normal(k_in, (2, 4, 16, 16), jnp.float32)
    input_size = 4 * 16 * 16
    params = init_params(k_par, input_size)

    out = jax.block_until_ready(global_reward_predictor(state, params))
    ref = reference_forward(state, params)
    assert out.shape == (2, 1), out.shape
    assert jnp.allclose(out, ref, atol=1e-3, rtol=1e-3), (out, ref)

    # bf16 MXU fast path: input is natively bf16 (auto-detected).
    out_bf16 = jax.block_until_ready(
        global_reward_predictor(state.astype(jnp.bfloat16), params))
    assert jnp.allclose(out_bf16, ref, atol=5e-2, rtol=5e-2), (out_bf16, ref)

    # --- config 2: F_in > TK exercises the K-reduction axis + resident w1 ---
    state2 = jax.random.normal(k_in2, (3, 2880), jnp.float32)
    params2 = init_params(k_par2, 2880)
    out2 = jax.block_until_ready(global_reward_predictor(state2, params2))
    ref2 = reference_forward(state2, params2)
    assert out2.shape == (3, 1), out2.shape
    assert jnp.allclose(out2, ref2, atol=2e-3, rtol=2e-3), (out2, ref2)

    # --- config 3: moderate batch exercises the 2-block parallel split ------
    state3 = jax.random.normal(k_in3, (300, 4, 16, 16), jnp.float32)
    out3 = jax.block_until_ready(global_reward_predictor(state3, params))
    ref3 = reference_forward(state3, params)
    assert out3.shape == (300, 1), out3.shape
    assert jnp.allclose(out3, ref3, atol=2e-3, rtol=2e-3)

    # TODO(synk): 'conv' net_type branch (Conv1d + Softmax) not implemented;
    # only the default 'lin' branch of the module is covered.
    print("KERNEL_OK")
</pallas_src>

<mosaic_0001>
module attributes {stable_mosaic.version = 11 : i64} {
  func.func @kernel(%arg0: i32, %arg1: i32, %arg2: memref<8x1024xf32, #tpu.memory_space<vmem>>, %arg3: memref<1024x128xf32, #tpu.memory_space<vmem>>, %arg4: memref<1x128xf32, #tpu.memory_space<vmem>>, %arg5: memref<128x64xf32, #tpu.memory_space<vmem>>, %arg6: memref<1x64xf32, #tpu.memory_space<vmem>>, %arg7: memref<1x64xf32, #tpu.memory_space<vmem>>, %arg8: memref<1x1xf32, #tpu.memory_space<vmem>>, %arg9: memref<1x1x8xf32, #tpu.memory_space<vmem>>) attributes {dimension_semantics = [#tpu.dimension_semantics<parallel>, #tpu.dimension_semantics<arbitrary>], iteration_bounds = array<i64: 1, 1>, scalar_prefetch = 0 : i64, scratch_operands = 0 : i64, tpu.core_type = #tpu.core_type<tc>, window_params = [{transform_indices = @transform_0, window_bounds = array<i64: 8, 1024>}, {pipeline_mode = #tpu.pipeline_mode<synchronous>, transform_indices = @transform_1, window_bounds = array<i64: 1024, 128>}, {pipeline_mode = #tpu.pipeline_mode<synchronous>, transform_indices = @transform_2, window_bounds = array<i64: 1, 128>}, {pipeline_mode = #tpu.pipeline_mode<synchronous>, transform_indices = @transform_3, window_bounds = array<i64: 128, 64>}, {pipeline_mode = #tpu.pipeline_mode<synchronous>, transform_indices = @transform_4, window_bounds = array<i64: 1, 64>}, {pipeline_mode = #tpu.pipeline_mode<synchronous>, transform_indices = @transform_5, window_bounds = array<i64: 1, 64>}, {pipeline_mode = #tpu.pipeline_mode<synchronous>, transform_indices = @transform_6, window_bounds = array<i64: 1, 1>}, {transform_indices = @transform_7, window_bounds = array<i64: 1, 1, 8>}]} {
    %c0 = arith.constant 0 : index
    %c0_0 = arith.constant 0 : index
    %0 = vector.load %arg2[%c0, %c0_0] : memref<8x1024xf32, #tpu.memory_space<vmem>>, vector<8x1024xf32>
    %c0_1 = arith.constant 0 : index
    %c0_2 = arith.constant 0 : index
    %1 = vector.load %arg3[%c0_1, %c0_2] : memref<1024x128xf32, #tpu.memory_space<vmem>>, vector<1024x128xf32>
    %cst = arith.constant dense<0.000000e+00> : vector<8x128xf32>
    %2 = tpu.matmul %0, %1, %cst {dimension_numbers = #tpu.dot_dimension_numbers<[1], [0], [0], [1], [0, 0, 1, 1], [], []>} : vector<8x1024xf32>, vector<1024x128xf32>, vector<8x128xf32> -> vector<8x128xf32>
    %c0_3 = arith.constant 0 : index
    %c0_4 = arith.constant 0 : index
    %3 = vector.load %arg4[%c0_3, %c0_4] : memref<1x128xf32, #tpu.memory_space<vmem>>, vector<1x128xf32>
    %4 = vector.broadcast %3 : vector<1x128xf32> to vector<8x128xf32>
    %5 = arith.addf %2, %4 : vector<8x128xf32>
    %c0_5 = arith.constant 0 : index
    %c0_6 = arith.constant 0 : index
    %6 = vector.load %arg5[%c0_5, %c0_6] : memref<128x64xf32, #tpu.memory_space<vmem>>, vector<128x64xf32>
    %c0_7 = arith.constant 0 : index
    %c0_8 = arith.constant 0 : index
    %7 = vector.load %arg6[%c0_7, %c0_8] : memref<1x64xf32, #tpu.memory_space<vmem>>, vector<1x64xf32>
    %c0_9 = arith.constant 0 : index
    %c0_10 = arith.constant 0 : index
    %8 = vector.load %arg7[%c0_9, %c0_10] : memref<1x64xf32, #tpu.memory_space<vmem>>, vector<1x64xf32>
    %c0_11 = arith.constant 0 : index
    %c0_12 = arith.constant 0 : index
    %9 = vector.load %arg8[%c0_11, %c0_12] : memref<1x1xf32, #tpu.memory_space<vmem>>, vector<1x1xf32>
    %cst_13 = arith.constant 0.000000e+00 : f32
    %10 = vector.broadcast %cst_13 : f32 to vector<8x128xf32>
    %11 = arith.maximumf %5, %10 : vector<8x128xf32>
    %cst_14 = arith.constant dense<0.000000e+00> : vector<8x64xf32>
    %12 = tpu.matmul %11, %6, %cst_14 {dimension_numbers = #tpu.dot_dimension_numbers<[1], [0], [0], [1], [0, 0, 1, 1], [], []>} : vector<8x128xf32>, vector<128x64xf32>, vector<8x64xf32> -> vector<8x64xf32>
    %13 = vector.broadcast %7 : vector<1x64xf32> to vector<8x64xf32>
    %14 = arith.addf %12, %13 : vector<8x64xf32>
    %cst_15 = arith.constant 0.000000e+00 : f32
    %15 = vector.broadcast %cst_15 : f32 to vector<8x64xf32>
    %16 = arith.maximumf %14, %15 : vector<8x64xf32>
    %17 = vector.broadcast %8 : vector<1x64xf32> to vector<8x64xf32>
    %18 = arith.mulf %16, %17 : vector<8x64xf32>
    %cst_16 = arith.constant dense<0.000000e+00> : vector<8xf32>
    %19 = vector.multi_reduction <add>, %18, %cst_16 [1] : vector<8x64xf32> to vector<8xf32>
    %20 = vector.shape_cast %19 : vector<8xf32> to vector<1x8xf32>
    %21 = vector.broadcast %9 : vector<1x1xf32> to vector<1x8xf32>
    %22 = arith.addf %20, %21 : vector<1x8xf32>
    %23 = vector.shape_cast %22 : vector<1x8xf32> to vector<1x1x8xf32>
    %c0_17 = arith.constant 0 : index
    %c0_18 = arith.constant 0 : index
    %c0_19 = arith.constant 0 : index
    %24 = vector.load %arg9[%c0_17, %c0_18, %c0_19] : memref<1x1x8xf32, #tpu.memory_space<vmem>>, vector<1x1x8xf32>
    tpu.vector_store %arg9[%c0_17, %c0_18, %c0_19], %23 {strides = array<i32>} : memref<1x1x8xf32, #tpu.memory_space<vmem>>, vector<1x1x8xf32>,
    return
  }
  func.func @transform_0(%arg0: i32, %arg1: i32) -> (i32, i32) {
    %c0_i32 = arith.constant 0 : i32
    return %arg0, %arg1 : i32, i32
  }
  func.func @transform_1(%arg0: i32, %arg1: i32) -> (i32, i32) {
    %c0_i32 = arith.constant 0 : i32
    %c0_i32_0 = arith.constant 0 : i32
    %c0_i32_1 = arith.constant 0 : i32
    return %c0_i32, %c0_i32_0 : i32, i32
  }
  func.func @transform_2(%arg0: i32, %arg1: i32) -> (i32, i32) {
    %c0_i32 = arith.constant 0 : i32
    %c0_i32_0 = arith.constant 0 : i32
    %c0_i32_1 = arith.constant 0 : i32
    return %c0_i32, %c0_i32_0 : i32, i32
  }
  func.func @transform_3(%arg0: i32, %arg1: i32) -> (i32, i32) {
    %c0_i32 = arith.constant 0 : i32
    %c0_i32_0 = arith.constant 0 : i32
    %c0_i32_1 = arith.constant 0 : i32
    return %c0_i32, %c0_i32_0 : i32, i32
  }
  func.func @transform_4(%arg0: i32, %arg1: i32) -> (i32, i32) {
    %c0_i32 = arith.constant 0 : i32
    %c0_i32_0 = arith.constant 0 : i32
    %c0_i32_1 = arith.constant 0 : i32
    return %c0_i32, %c0_i32_0 : i32, i32
  }
  func.func @transform_5(%arg0: i32, %arg1: i32) -> (i32, i32) {
    %c0_i32 = arith.constant 0 : i32
    %c0_i32_0 = arith.constant 0 : i32
    %c0_i32_1 = arith.constant 0 : i32
    return %c0_i32, %c0_i32_0 : i32, i32
  }
  func.func @transform_6(%arg0: i32, %arg1: i32) -> (i32, i32) {
    %c0_i32 = arith.constant 0 : i32
    %c0_i32_0 = arith.constant 0 : i32
    %c0_i32_1 = arith.constant 0 : i32
    return %c0_i32, %c0_i32_0 : i32, i32
  }
  func.func @transform_7(%arg0: i32, %arg1: i32) -> (i32, i32, i32) {
    %c0_i32 = arith.constant 0 : i32
    %c0_i32_0 = arith.constant 0 : i32
    %c0_i32_1 = arith.constant 0 : i32
    return %arg0, %c0_i32, %c0_i32_0 : i32, i32, i32
  }
}

</mosaic_0001>

<llo_original>
// kernel: tpu_custom_call.1
$region0: #{tpu_custom_call.1}
  #allocation0 [shape = 'u32[]', space=smem, size = 0x4, offset = 0x4, fixed_abs, tag = 'smem constant byte address 0x4 - core index']
  #allocation1 [shape = 'u32[72,128]{1,0:T(1,128)}', space=vmem, size = 0x9000, scoped, tag = 'internal scratch']
  #allocation2 [shape = 'f32[1,1]{1,0:T(1,128)S(1)}', space=vmem, size = 0x200, scoped, tag = 'scoped memory for tpu_custom_call.1']
  %s0 = inlined_call_operand.vmem [shape: f32[8,1024], index: 0, kind: input, shape index: {}]
  %s1 = inlined_call_operand.hbm [shape: f32[1024,128], index: 1, kind: input, shape index: {}]
  %s2 = inlined_call_operand.vmem [shape: f32[1,128], index: 2, kind: input, shape index: {}]
  %s3 = inlined_call_operand.vmem [shape: f32[128,64], index: 3, kind: input, shape index: {}]
  %s4 = inlined_call_operand.vmem [shape: f32[1,64], index: 4, kind: input, shape index: {}]
  %s5 = inlined_call_operand.vmem [shape: f32[1,64], index: 5, kind: input, shape index: {}]
  %s6 = inlined_call_operand.<no memory space> [shape: f32[1,1], index: 6, kind: input, shape index: {}]
  %s7 = inlined_call_operand.hbm [shape: f32[1,1,8], index: 7, kind: output, shape index: {}]
  %s8 = sld [smem:[#allocation0]]
  $region42: #{tpu_custom_call.1} parent=0
    _
  %s10 = ssub.s32 1, %s8
  %s11 = scalar_select 0, %s10, %s8
  %v12 = vstv %s6
  %13 = vst [vmem:[#allocation2] sm:$0x1] %v12
  $region1: #{tpu_custom_call.1} parent=0
    #allocation3 [shape = 'u8[524288]{0}', space=vmem, size = 0x80000, scoped, tag = 'input window, operand 1, single buffered']
    #allocation4 [shape = 's32[1]{0}', space=sflag, size = 0x4, scoped, tag = 'scoped memory for tpu_custom_call.1']
    #allocation5 [shape = 's32[1]{0}', space=sflag, size = 0x4, scoped, tag = 'scoped memory for tpu_custom_call.1']
    #allocation6 [shape = 'u8[512]{0}', space=vmem, size = 0x400, scoped, tag = 'output window, operand 0, single buffered']
    %14 = vsyncpa [#allocation4], 0
    %15 = vsyncpa [#allocation5], 0
    // Predicated region
    $region2: #{tpu_custom_call.1} parent=1 // pred_check
      _
    $region3: #{tpu_custom_call.1} parent=1 // pred_check_branch
      %17 = sbr.rel (0) target = $region5
    $region4: #{tpu_custom_call.1} parent=1 // pred_region
      _
    $region5: #{tpu_custom_call.1} parent=1 // pred_fallthru
      _
    // Predicated region
    $region6: #{tpu_custom_call.1} parent=1 // pred_check
      _
    $region7: #{tpu_custom_call.1} parent=1 // pred_check_branch
      %19 = sbr.rel (0) target = $region9
    $region8: #{tpu_custom_call.1} parent=1 // pred_region
      %21 = vsyncadd [#allocation4], 0
      %s22 = sshll.u32 %s1, 4
      %s23 = int_to_ptr.hbm [resolvable:$true] %s22
      %s24 = sshll.u32 [#allocation3], 4
      %s25 = int_to_ptr.vmem [resolvable:$true] %s24
      %30 = dma.hbm_to_vmem [thread:$0]  %s23, 16384, %s25, [#allocation4], 128, 128, 8
    $region9: #{tpu_custom_call.1} parent=1 // pred_fallthru
      _
    // Predicated region
    $region10: #{tpu_custom_call.1} parent=1 // pred_check
      _
    $region11: #{tpu_custom_call.1} parent=1 // pred_check_branch
      %32 = sbr.rel (0) target = $region13
    $region12: #{tpu_custom_call.1} parent=1 // pred_region
      _
    $region13: #{tpu_custom_call.1} parent=1 // pred_fallthru
      _
    // Predicated region
    $region14: #{tpu_custom_call.1} parent=1 // pred_check
      _
    $region15: #{tpu_custom_call.1} parent=1 // pred_check_branch
      %34 = sbr.rel (0) target = $region17
    $region16: #{tpu_custom_call.1} parent=1 // pred_region
      _
    $region17: #{tpu_custom_call.1} parent=1 // pred_fallthru
      _
    // Predicated region
    $region18: #{tpu_custom_call.1} parent=1 // pred_check
      _
    $region19: #{tpu_custom_call.1} parent=1 // pred_check_branch
      %36 = sbr.rel (0) target = $region21
    $region20: #{tpu_custom_call.1} parent=1 // pred_region
      _
    $region21: #{tpu_custom_call.1} parent=1 // pred_fallthru
      _
    // Predicated region
    $region22: #{tpu_custom_call.1} parent=1 // pred_check
      _
    $region23: #{tpu_custom_call.1} parent=1 // pred_check_branch
      %38 = sbr.rel (0) target = $region25
    $region24: #{tpu_custom_call.1} parent=1 // pred_region
      _
    $region25: #{tpu_custom_call.1} parent=1 // pred_fallthru
      _
    // Predicated region
    $region26: #{tpu_custom_call.1} parent=1 // pred_check
      _
    $region27: #{tpu_custom_call.1} parent=1 // pred_check_branch
      %40 = sbr.rel (0) target = $region29
    $region28: #{tpu_custom_call.1} parent=1 // pred_region
      _
    $region29: #{tpu_custom_call.1} parent=1 // pred_fallthru
      _
    // Predicated region
    $region30: #{tpu_custom_call.1} parent=1 // pred_check
      _
    $region31: #{tpu_custom_call.1} parent=1 // pred_check_branch
      %42 = sbr.rel (0) target = $region33
    $region32: #{tpu_custom_call.1} parent=1 // pred_region
      %44 = dma.done [#allocation4], 16384
    $region33: #{tpu_custom_call.1} parent=1 // pred_fallthru
      _
    %v45 = vld [vmem:[%s0] sm:$0xff]
    %v46 = vld [vmem:[%s0 + $0x8] sm:$0xff]
    %v47 = vld [vmem:[%s0 + $0x10] sm:$0xff]
    %v48 = vld [vmem:[%s0 + $0x18] sm:$0xff]
    %v49 = vld [vmem:[%s0 + $0x20] sm:$0xff]
    %v50 = vld [vmem:[%s0 + $0x28] sm:$0xff]
    %v51 = vld [vmem:[%s0 + $0x30] sm:$0xff]
    %v52 = vld [vmem:[%s0 + $0x38] sm:$0xff]
    %v53 = vld [vmem:[#allocation3] sm:$0xff]
    %v54 = vld [vmem:[#allocation3 + $0x8] sm:$0xff]
    %v55 = vld [vmem:[#allocation3 + $0x10] sm:$0xff]
    %v56 = vld [vmem:[#allocation3 + $0x18] sm:$0xff]
    %v57 = vld [vmem:[#allocation3 + $0x20] sm:$0xff]
    %v58 = vld [vmem:[#allocation3 + $0x28] sm:$0xff]
    %v59 = vld [vmem:[#allocation3 + $0x30] sm:$0xff]
    %v60 = vld [vmem:[#allocation3 + $0x38] sm:$0xff]
    %v61 = vld [vmem:[#allocation3 + $0x40] sm:$0xff]
    %v62 = vld [vmem:[#allocation3 + $0x48] sm:$0xff]
    %v63 = vld [vmem:[#allocation3 + $0x50] sm:$0xff]
    %v64 = vld [vmem:[#allocation3 + $0x58] sm:$0xff]
    %v65 = vld [vmem:[#allocation3 + $0x60] sm:$0xff]
    %v66 = vld [vmem:[#allocation3 + $0x68] sm:$0xff]
    %v67 = vld [vmem:[#allocation3 + $0x70] sm:$0xff]
    %v68 = vld [vmem:[#allocation3 + $0x78] sm:$0xff]
    %v69 = vld [vmem:[#allocation3 + $0x80] sm:$0xff]
    %v70 = vld [vmem:[#allocation3 + $0x88] sm:$0xff]
    %v71 = vld [vmem:[#allocation3 + $0x90] sm:$0xff]
    %v72 = vld [vmem:[#allocation3 + $0x98] sm:$0xff]
    %v73 = vld [vmem:[#allocation3 + $0xa0] sm:$0xff]
    %v74 = vld [vmem:[#allocation3 + $0xa8] sm:$0xff]
    %v75 = vld [vmem:[#allocation3 + $0xb0] sm:$0xff]
    %v76 = vld [vmem:[#allocation3 + $0xb8] sm:$0xff]
    %v77 = vld [vmem:[#allocation3 + $0xc0] sm:$0xff]
    %v78 = vld [vmem:[#allocation3 + $0xc8] sm:$0xff]
    %v79 = vld [vmem:[#allocation3 + $0xd0] sm:$0xff]
    %v80 = vld [vmem:[#allocation3 + $0xd8] sm:$0xff]
    %v81 = vld [vmem:[#allocation3 + $0xe0] sm:$0xff]
    %v82 = vld [vmem:[#allocation3 + $0xe8] sm:$0xff]
    %v83 = vld [vmem:[#allocation3 + $0xf0] sm:$0xff]
    %v84 = vld [vmem:[#allocation3 + $0xf8] sm:$0xff]
    %v85 = vld [vmem:[#allocation3 + $0x100] sm:$0xff]
    %v86 = vld [vmem:[#allocation3 + $0x108] sm:$0xff]
    %v87 = vld [vmem:[#allocation3 + $0x110] sm:$0xff]
    %v88 = vld [vmem:[#allocation3 + $0x118] sm:$0xff]
    %v89 = vld [vmem:[#allocation3 + $0x120] sm:$0xff]
    %v90 = vld [vmem:[#allocation3 + $0x128] sm:$0xff]
    %v91 = vld [vmem:[#allocation3 + $0x130] sm:$0xff]
    %v92 = vld [vmem:[#allocation3 + $0x138] sm:$0xff]
    %v93 = vld [vmem:[#allocation3 + $0x140] sm:$0xff]
    %v94 = vld [vmem:[#allocation3 + $0x148] sm:$0xff]
    %v95 = vld [vmem:[#allocation3 + $0x150] sm:$0xff]
    %v96 = vld [vmem:[#allocation3 + $0x158] sm:$0xff]
    %v97 = vld [vmem:[#allocation3 + $0x160] sm:$0xff]
    %v98 = vld [vmem:[#allocation3 + $0x168] sm:$0xff]
    %v99 = vld [vmem:[#allocation3 + $0x170] sm:$0xff]
    %v100 = vld [vmem:[#allocation3 + $0x178] sm:$0xff]
    %v101 = vld [vmem:[#allocation3 + $0x180] sm:$0xff]
    %v102 = vld [vmem:[#allocation3 + $0x188] sm:$0xff]
    %v103 = vld [vmem:[#allocation3 + $0x190] sm:$0xff]
    %v104 = vld [vmem:[#allocation3 + $0x198] sm:$0xff]
    %v105 = vld [vmem:[#allocation3 + $0x1a0] sm:$0xff]
    %v106 = vld [vmem:[#allocation3 + $0x1a8] sm:$0xff]
    %v107 = vld [vmem:[#allocation3 + $0x1b0] sm:$0xff]
    %v108 = vld [vmem:[#allocation3 + $0x1b8] sm:$0xff]
    %v109 = vld [vmem:[#allocation3 + $0x1c0] sm:$0xff]
    %v110 = vld [vmem:[#allocation3 + $0x1c8] sm:$0xff]
    %v111 = vld [vmem:[#allocation3 + $0x1d0] sm:$0xff]
    %v112 = vld [vmem:[#allocation3 + $0x1d8] sm:$0xff]
    %v113 = vld [vmem:[#allocation3 + $0x1e0] sm:$0xff]
    %v114 = vld [vmem:[#allocation3 + $0x1e8] sm:$0xff]
    %v115 = vld [vmem:[#allocation3 + $0x1f0] sm:$0xff]
    %v116 = vld [vmem:[#allocation3 + $0x1f8] sm:$0xff]
    %v117 = vld [vmem:[#allocation3 + $0x200] sm:$0xff]
    %v118 = vld [vmem:[#allocation3 + $0x208] sm:$0xff]
    %v119 = vld [vmem:[#allocation3 + $0x210] sm:$0xff]
    %v120 = vld [vmem:[#allocation3 + $0x218] sm:$0xff]
    %v121 = vld [vmem:[#allocation3 + $0x220] sm:$0xff]
    %v122 = vld [vmem:[#allocation3 + $0x228] sm:$0xff]
    %v123 = vld [vmem:[#allocation3 + $0x230] sm:$0xff]
    %v124 = vld [vmem:[#allocation3 + $0x238] sm:$0xff]
    %v125 = vld [vmem:[#allocation3 + $0x240] sm:$0xff]
    %v126 = vld [vmem:[#allocation3 + $0x248] sm:$0xff]
    %v127 = vld [vmem:[#allocation3 + $0x250] sm:$0xff]
    %v128 = vld [vmem:[#allocation3 + $0x258] sm:$0xff]
    %v129 = vld [vmem:[#allocation3 + $0x260] sm:$0xff]
    %v130 = vld [vmem:[#allocation3 + $0x268] sm:$0xff]
    %v131 = vld [vmem:[#allocation3 + $0x270] sm:$0xff]
    %v132 = vld [vmem:[#allocation3 + $0x278] sm:$0xff]
    %v133 = vld [vmem:[#allocation3 + $0x280] sm:$0xff]
    %v134 = vld [vmem:[#allocation3 + $0x288] sm:$0xff]
    %v135 = vld [vmem:[#allocation3 + $0x290] sm:$0xff]
    %v136 = vld [vmem:[#allocation3 + $0x298] sm:$0xff]
    %v137 = vld [vmem:[#allocation3 + $0x2a0] sm:$0xff]
    %v138 = vld [vmem:[#allocation3 + $0x2a8] sm:$0xff]
    %v139 = vld [vmem:[#allocation3 + $0x2b0] sm:$0xff]
    %v140 = vld [vmem:[#allocation3 + $0x2b8] sm:$0xff]
    %v141 = vld [vmem:[#allocation3 + $0x2c0] sm:$0xff]
    %v142 = vld [vmem:[#allocation3 + $0x2c8] sm:$0xff]
    %v143 = vld [vmem:[#allocation3 + $0x2d0] sm:$0xff]
    %v144 = vld [vmem:[#allocation3 + $0x2d8] sm:$0xff]
    %v145 = vld [vmem:[#allocation3 + $0x2e0] sm:$0xff]
    %v146 = vld [vmem:[#allocation3 + $0x2e8] sm:$0xff]
    %v147 = vld [vmem:[#allocation3 + $0x2f0] sm:$0xff]
    %v148 = vld [vmem:[#allocation3 + $0x2f8] sm:$0xff]
    %v149 = vld [vmem:[#allocation3 + $0x300] sm:$0xff]
    %v150 = vld [vmem:[#allocation3 + $0x308] sm:$0xff]
    %v151 = vld [vmem:[#allocation3 + $0x310] sm:$0xff]
    %v152 = vld [vmem:[#allocation3 + $0x318] sm:$0xff]
    %v153 = vld [vmem:[#allocation3 + $0x320] sm:$0xff]
    %v154 = vld [vmem:[#allocation3 + $0x328] sm:$0xff]
    %v155 = vld [vmem:[#allocation3 + $0x330] sm:$0xff]
    %v156 = vld [vmem:[#allocation3 + $0x338] sm:$0xff]
    %v157 = vld [vmem:[#allocation3 + $0x340] sm:$0xff]
    %v158 = vld [vmem:[#allocation3 + $0x348] sm:$0xff]
    %v159 = vld [vmem:[#allocation3 + $0x350] sm:$0xff]
    %v160 = vld [vmem:[#allocation3 + $0x358] sm:$0xff]
    %v161 = vld [vmem:[#allocation3 + $0x360] sm:$0xff]
    %v162 = vld [vmem:[#allocation3 + $0x368] sm:$0xff]
    %v163 = vld [vmem:[#allocation3 + $0x370] sm:$0xff]
    %v164 = vld [vmem:[#allocation3 + $0x378] sm:$0xff]
    %v165 = vld [vmem:[#allocation3 + $0x380] sm:$0xff]
    %v166 = vld [vmem:[#allocation3 + $0x388] sm:$0xff]
    %v167 = vld [vmem:[#allocation3 + $0x390] sm:$0xff]
    %v168 = vld [vmem:[#allocation3 + $0x398] sm:$0xff]
    %v169 = vld [vmem:[#allocation3 + $0x3a0] sm:$0xff]
    %v170 = vld [vmem:[#allocation3 + $0x3a8] sm:$0xff]
    %v171 = vld [vmem:[#allocation3 + $0x3b0] sm:$0xff]
    %v172 = vld [vmem:[#allocation3 + $0x3b8] sm:$0xff]
    %v173 = vld [vmem:[#allocation3 + $0x3c0] sm:$0xff]
    %v174 = vld [vmem:[#allocation3 + $0x3c8] sm:$0xff]
    %v175 = vld [vmem:[#allocation3 + $0x3d0] sm:$0xff]
    %v176 = vld [vmem:[#allocation3 + $0x3d8] sm:$0xff]
    %v177 = vld [vmem:[#allocation3 + $0x3e0] sm:$0xff]
    %v178 = vld [vmem:[#allocation3 + $0x3e8] sm:$0xff]
    %v179 = vld [vmem:[#allocation3 + $0x3f0] sm:$0xff]
    %v180 = vld [vmem:[#allocation3 + $0x3f8] sm:$0xff]
    %v181 = vld [vmem:[%s2] sm:$0x1]
    %v183 = vperm.slane %v181, 0
    %185 = vmatpush.msra.mxu0 %v68
    %186 = vmatpush.msra.mxu0 %v67
    %187 = vmatpush.msra.mxu0 %v66
    %188 = vmatpush.msra.mxu0 %v65
    %189 = vmatpush.msra.mxu0 %v64
    %190 = vmatpush.msra.mxu0 %v63
    %191 = vmatpush.msra.mxu0 %v62
    %192 = vmatpush.msra.mxu0 %v61
    %193 = vmatpush.msra.mxu0 %v60
    %194 = vmatpush.msra.mxu0 %v59
    %195 = vmatpush.msra.mxu0 %v58
    %196 = vmatpush.msra.mxu0 %v57
    %197 = vmatpush.msra.mxu0 %v56
    %198 = vmatpush.msra.mxu0 %v55
    %199 = vmatpush.msra.mxu0 %v54
    %200 = vmatpush.msra.mxu0 %v53
    %201 = vmatmul.f32.gmra.mxu0 %v45
    %v202 = vpop.f32.mrf.mxu0
    %v203 = vadd.f32 %v183, %v202
    %204 = vdwg.mxu0
    %205 = vmatpush.msra.mxu0 %v84
    %206 = vmatpush.msra.mxu0 %v83
    %207 = vmatpush.msra.mxu0 %v82
    %208 = vmatpush.msra.mxu0 %v81
    %209 = vmatpush.msra.mxu0 %v80
    %210 = vmatpush.msra.mxu0 %v79
    %211 = vmatpush.msra.mxu0 %v78
    %212 = vmatpush.msra.mxu0 %v77
    %213 = vmatpush.msra.mxu0 %v76
    %214 = vmatpush.msra.mxu0 %v75
    %215 = vmatpush.msra.mxu0 %v74
    %216 = vmatpush.msra.mxu0 %v73
    %217 = vmatpush.msra.mxu0 %v72
    %218 = vmatpush.msra.mxu0 %v71
    %219 = vmatpush.msra.mxu0 %v70
    %220 = vmatpush.msra.mxu0 %v69
    %221 = vmatmul.f32.gmra.mxu0 %v46
    %v222 = vpop.f32.mrf.mxu0
    %v223 = vadd.f32 %v203, %v222
    %224 = vdwg.mxu0
    %225 = vmatpush.msra.mxu0 %v100
    %226 = vmatpush.msra.mxu0 %v99
    %227 = vmatpush.msra.mxu0 %v98
    %228 = vmatpush.msra.mxu0 %v97
    %229 = vmatpush.msra.mxu0 %v96
    %230 = vmatpush.msra.mxu0 %v95
    %231 = vmatpush.msra.mxu0 %v94
    %232 = vmatpush.msra.mxu0 %v93
    %233 = vmatpush.msra.mxu0 %v92
    %234 = vmatpush.msra.mxu0 %v91
    %235 = vmatpush.msra.mxu0 %v90
    %236 = vmatpush.msra.mxu0 %v89
    %237 = vmatpush.msra.mxu0 %v88
    %238 = vmatpush.msra.mxu0 %v87
    %239 = vmatpush.msra.mxu0 %v86
    %240 = vmatpush.msra.mxu0 %v85
    %241 = vmatmul.f32.gmra.mxu0 %v47
    %v242 = vpop.f32.mrf.mxu0
    %v243 = vadd.f32 %v223, %v242
    %244 = vdwg.mxu0
    %245 = vmatpush.msra.mxu0 %v116
    %246 = vmatpush.msra.mxu0 %v115
    %247 = vmatpush.msra.mxu0 %v114
    %248 = vmatpush.msra.mxu0 %v113
    %249 = vmatpush.msra.mxu0 %v112
    %250 = vmatpush.msra.mxu0 %v111
    %251 = vmatpush.msra.mxu0 %v110
    %252 = vmatpush.msra.mxu0 %v109
    %253 = vmatpush.msra.mxu0 %v108
    %254 = vmatpush.msra.mxu0 %v107
    %255 = vmatpush.msra.mxu0 %v106
    %256 = vmatpush.msra.mxu0 %v105
    %257 = vmatpush.msra.mxu0 %v104
    %258 = vmatpush.msra.mxu0 %v103
    %259 = vmatpush.msra.mxu0 %v102
    %260 = vmatpush.msra.mxu0 %v101
    %261 = vmatmul.f32.gmra.mxu0 %v48
    %v262 = vpop.f32.mrf.mxu0
    %v263 = vadd.f32 %v243, %v262
    %264 = vdwg.mxu0
    %265 = vmatpush.msra.mxu0 %v132
    %266 = vmatpush.msra.mxu0 %v131
    %267 = vmatpush.msra.mxu0 %v130
    %268 = vmatpush.msra.mxu0 %v129
    %269 = vmatpush.msra.mxu0 %v128
    %270 = vmatpush.msra.mxu0 %v127
    %271 = vmatpush.msra.mxu0 %v126
    %272 = vmatpush.msra.mxu0 %v125
    %273 = vmatpush.msra.mxu0 %v124
    %274 = vmatpush.msra.mxu0 %v123
    %275 = vmatpush.msra.mxu0 %v122
    %276 = vmatpush.msra.mxu0 %v121
    %277 = vmatpush.msra.mxu0 %v120
    %278 = vmatpush.msra.mxu0 %v119
    %279 = vmatpush.msra.mxu0 %v118
    %280 = vmatpush.msra.mxu0 %v117
    %281 = vmatmul.f32.gmra.mxu0 %v49
    %v282 = vpop.f32.mrf.mxu0
    %v283 = vadd.f32 %v263, %v282
    %284 = vdwg.mxu0
    %285 = vmatpush.msra.mxu0 %v148
    %286 = vmatpush.msra.mxu0 %v147
    %287 = vmatpush.msra.mxu0 %v146
    %288 = vmatpush.msra.mxu0 %v145
    %289 = vmatpush.msra.mxu0 %v144
    %290 = vmatpush.msra.mxu0 %v143
    %291 = vmatpush.msra.mxu0 %v142
    %292 = vmatpush.msra.mxu0 %v141
    %293 = vmatpush.msra.mxu0 %v140
    %294 = vmatpush.msra.mxu0 %v139
    %295 = vmatpush.msra.mxu0 %v138
    %296 = vmatpush.msra.mxu0 %v137
    %297 = vmatpush.msra.mxu0 %v136
    %298 = vmatpush.msra.mxu0 %v135
    %299 = vmatpush.msra.mxu0 %v134
    %300 = vmatpush.msra.mxu0 %v133
    %301 = vmatmul.f32.gmra.mxu0 %v50
    %v302 = vpop.f32.mrf.mxu0
    %v303 = vadd.f32 %v283, %v302
    %304 = vdwg.mxu0
    %305 = vmatpush.msra.mxu0 %v164
    %306 = vmatpush.msra.mxu0 %v163
    %307 = vmatpush.msra.mxu0 %v162
    %308 = vmatpush.msra.mxu0 %v161
    %309 = vmatpush.msra.mxu0 %v160
    %310 = vmatpush.msra.mxu0 %v159
    %311 = vmatpush.msra.mxu0 %v158
    %312 = vmatpush.msra.mxu0 %v157
    %313 = vmatpush.msra.mxu0 %v156
    %314 = vmatpush.msra.mxu0 %v155
    %315 = vmatpush.msra.mxu0 %v154
    %316 = vmatpush.msra.mxu0 %v153
    %317 = vmatpush.msra.mxu0 %v152
    %318 = vmatpush.msra.mxu0 %v151
    %319 = vmatpush.msra.mxu0 %v150
    %320 = vmatpush.msra.mxu0 %v149
    %321 = vmatmul.f32.gmra.mxu0 %v51
    %v322 = vpop.f32.mrf.mxu0
    %v323 = vadd.f32 %v303, %v322
    %324 = vdwg.mxu0
    %325 = vmatpush.msra.mxu0 %v180
    %326 = vmatpush.msra.mxu0 %v179
    %327 = vmatpush.msra.mxu0 %v178
    %328 = vmatpush.msra.mxu0 %v177
    %329 = vmatpush.msra.mxu0 %v176
    %330 = vmatpush.msra.mxu0 %v175
    %331 = vmatpush.msra.mxu0 %v174
    %332 = vmatpush.msra.mxu0 %v173
    %333 = vmatpush.msra.mxu0 %v172
    %334 = vmatpush.msra.mxu0 %v171
    %335 = vmatpush.msra.mxu0 %v170
    %336 = vmatpush.msra.mxu0 %v169
    %337 = vmatpush.msra.mxu0 %v168
    %338 = vmatpush.msra.mxu0 %v167
    %339 = vmatpush.msra.mxu0 %v166
    %340 = vmatpush.msra.mxu0 %v165
    %341 = vmatmul.f32.gmra.mxu0 %v52
    %v342 = vpop.f32.mrf.mxu0
    %v343 = vadd.f32 %v323, %v342
    %344 = vdwg.mxu0
    %v345 = vld [vmem:[%s3] sm:$0xff]
    %v346 = vld [vmem:[%s3 + $0x8] sm:$0xff]
    %v347 = vld [vmem:[%s3 + $0x10] sm:$0xff]
    %v348 = vld [vmem:[%s3 + $0x18] sm:$0xff]
    %v349 = vld [vmem:[%s3 + $0x20] sm:$0xff]
    %v350 = vld [vmem:[%s3 + $0x28] sm:$0xff]
    %v351 = vld [vmem:[%s3 + $0x30] sm:$0xff]
    %v352 = vld [vmem:[%s3 + $0x38] sm:$0xff]
    %v353 = vld [vmem:[%s3 + $0x40] sm:$0xff]
    %v354 = vld [vmem:[%s3 + $0x48] sm:$0xff]
    %v355 = vld [vmem:[%s3 + $0x50] sm:$0xff]
    %v356 = vld [vmem:[%s3 + $0x58] sm:$0xff]
    %v357 = vld [vmem:[%s3 + $0x60] sm:$0xff]
    %v358 = vld [vmem:[%s3 + $0x68] sm:$0xff]
    %v359 = vld [vmem:[%s3 + $0x70] sm:$0xff]
    %v360 = vld [vmem:[%s3 + $0x78] sm:$0xff]
    %v361 = vld [vmem:[%s4] sm:$0x1]
    %v362 = vld [vmem:[%s5] sm:$0x1]
    %v363 = vld [vmem:[#allocation2] sm:$0x1]
    %v364 = vmax.f32 %v343, 0.0
    %v366 = vperm.slane %v361, 0
    %368 = vmatpush.msra.mxu0 %v360
    %369 = vmatpush.msra.mxu0 %v359
    %370 = vmatpush.msra.mxu0 %v358
    %371 = vmatpush.msra.mxu0 %v357
    %372 = vmatpush.msra.mxu0 %v356
    %373 = vmatpush.msra.mxu0 %v355
    %374 = vmatpush.msra.mxu0 %v354
    %375 = vmatpush.msra.mxu0 %v353
    %376 = vmatpush.msra.mxu0 %v352
    %377 = vmatpush.msra.mxu0 %v351
    %378 = vmatpush.msra.mxu0 %v350
    %379 = vmatpush.msra.mxu0 %v349
    %380 = vmatpush.msra.mxu0 %v348
    %381 = vmatpush.msra.mxu0 %v347
    %382 = vmatpush.msra.mxu0 %v346
    %383 = vmatpush.msra.mxu0 %v345
    %384 = vmatmul.f32.gmra.mxu0 %v364
    %v385 = vpop.f32.mrf.mxu0
    %v386 = vadd.f32 %v366, %v385
    %387 = vdwg.mxu0
    %v388 = vmax.f32 %v386, 0.0
    %v390 = vperm.slane %v362, 0
    %v392 = vmul.f32 %v388, %v390
    %vm393 = vcmask 523264
    %v394 = vsel %vm393, %v392, 0.0
    %395 = vadd.xlane.f32.xlu0 %v394
    %v396 = vpop.xlane.xlu0 %395
    %398 = vset.pattern.permute.xlu0 0
    %399 = vperm.xlu0 %398, %v363
    %v400 = vpop.permute.xlu0 %399
    %v402 = vperm.slane %v400, 0
    %v403 = vadd.f32 %v396, %v402
    %v405 = vlaneseq
    %v406 = vand.u32 %v405, 127
    %v407 = vperm.slane %v403, %v406
    %vm409 = vcmask 57344
    %410 = vst.msk [vmem:[#allocation6] sm:$0x1] %vm409, %v407
    // Predicated region
    $region34: #{tpu_custom_call.1} parent=1 // pred_check
      _
    $region35: #{tpu_custom_call.1} parent=1 // pred_check_branch
      %412 = sbr.rel (0) target = $region37
    $region36: #{tpu_custom_call.1} parent=1 // pred_region
      %414 = vsyncadd [#allocation5], 0
      %s416 = sshll.u32 [#allocation6], 4
      %s417 = int_to_ptr.vmem [resolvable:$true] %s416
      %s418 = sshll.u32 %s7, 4
      %s419 = int_to_ptr.hbm [resolvable:$true] %s418
      %421 = dma.vmem_to_hbm [thread:$0]  %s417, 16, %s419, [#allocation5]
    $region37: #{tpu_custom_call.1} parent=1 // pred_fallthru
      _
    // Predicated region
    $region38: #{tpu_custom_call.1} parent=1 // pred_check
      _
    $region39: #{tpu_custom_call.1} parent=1 // pred_check_branch
      %423 = sbr.rel (0) target = $region41
    $region40: #{tpu_custom_call.1} parent=1 // pred_region
      %425 = dma.done [#allocation5], 16
    $region41: #{tpu_custom_call.1} parent=1 // pred_fallthru
      _
    %426 = vsyncpa [#allocation4], 1
    %427 = vsyncpa [#allocation5], 1

</llo_original>
